<compile_context>
chip_gen: v5e
topology: v5e:2x2
jax: 0.10.0
libtpu: 0.0.40
codegen_flags: <defaults>
</compile_context>

<pallas_src>
import jax
import jax.numpy as jnp
from jax.experimental import pallas as pl
from jax.experimental.pallas import tpu as pltpu


def lstm_kernel(xt_ref, wih_ref, whh_ref, b_ref, out_ref):
    """Fused LSTM(25 -> 1) forward over the whole sequence.

    xt_ref:  (I, T*B)  input, flattened & transposed in the wrapper
    wih_ref: (4, I)    W_ih with the g-gate row pre-scaled by 2
    whh_ref: (4, 1)    W_hh with the g-gate row pre-scaled by 2
    b_ref:   (4, 1)    b_ih + b_hh with the g-gate row pre-scaled by 2
    out_ref: (T, B)    per-step hidden states (hidden dim squeezed)
    """
    G = wih_ref.shape[0]      # 4 * hidden = 4
    T, B = out_ref.shape

    # --- Hoisted input projection: ONE small matmul for all timesteps,
    #     bias folded in once.  Result stays in vregs (4 x T*B f32). ---
    xproj = jnp.dot(wih_ref[...], xt_ref[...],
                    preferred_element_type=jnp.float32) + b_ref[...]   # (4, T*B)

    # Loop-invariant broadcast hoisted out of the recurrence.
    whh_b = jnp.broadcast_to(whh_ref[...], (G, B))                      # (4, B)

    h = jnp.zeros((1, B), jnp.float32)
    c = jnp.zeros((1, B), jnp.float32)
    hs = []

    # --- Serial recurrence: pure VPU/EUP work, 2 EUP pushes per step,
    #     h/c carried in vregs, static slices (T is small & static). ---
    for t in range(T):
        gates = xproj[:, t * B:(t + 1) * B] + whh_b * h   # (4, B), no MXU
        sig = jax.nn.sigmoid(gates)                       # EUP push 1 (all 4 gates)
        i_g = sig[0:1, :]
        f_g = sig[1:2, :]
        g_g = 2.0 * sig[2:3, :] - 1.0                     # == tanh(g_pre) (g row pre-scaled by 2)
        o_g = sig[3:4, :]
        c = f_g * c + i_g * g_g
        h = o_g * jnp.tanh(c)                             # EUP push 2
        hs.append(h)

    # --- Epilogue: stores kept out of the serial recurrence. ---
    for t in range(T):
        out_ref[pl.ds(t, 1), :] = hs[t]


def lstm_forward(x, w_ih, w_hh, b_ih, b_hh):
    """x: (T, B, 25) f32.  Returns (T, B) f32 (hidden dim squeezed)."""
    T, B, I = x.shape
    G = w_ih.shape[0]                                   # 4 * hidden = 4

    # Pre-scale the g-gate (row 2) by 2 so tanh can be recovered from the
    # single sigmoid pass inside the kernel: tanh(x) = 2*sigmoid(2x) - 1.
    g_scale = jnp.array([1.0, 1.0, 2.0, 1.0], jnp.float32).reshape(G, 1)
    wih = (w_ih.astype(jnp.float32)) * g_scale                          # (4, 25)
    whh = (w_hh.astype(jnp.float32)) * g_scale                          # (4, 1)
    bias = ((b_ih + b_hh).astype(jnp.float32).reshape(G, 1)) * g_scale  # (4, 1)

    # Flatten + transpose in the wrapper (pure XLA layout plumbing):
    # column index = t*B + b, so the kernel slices contiguous columns per step.
    xt = x.astype(jnp.float32).reshape(T * B, I).T                      # (25, T*B)

    out = pl.pallas_call(
        lstm_kernel,
        out_shape=jax.ShapeDtypeStruct((T, B), jnp.float32),
        in_specs=[
            pl.BlockSpec(memory_space=pltpu.MemorySpace.VMEM),  # x (whole seq)
            pl.BlockSpec(memory_space=pltpu.MemorySpace.VMEM),  # W_ih (scaled)
            pl.BlockSpec(memory_space=pltpu.MemorySpace.VMEM),  # W_hh (scaled)
            pl.BlockSpec(memory_space=pltpu.MemorySpace.VMEM),  # bias (scaled)
        ],
        out_specs=pl.BlockSpec(memory_space=pltpu.MemorySpace.VMEM),
    )(xt, wih, whh, bias)

    return out


def lstm_ref(x, w_ih, w_hh, b_ih, b_hh):
    """Pure-JAX reference (lax.scan) for correctness checking."""
    T, B, _ = x.shape
    H = w_hh.shape[1]

    def step(carry, x_t):
        h, c = carry
        gates = x_t @ w_ih.T + h @ w_hh.T + b_ih + b_hh
        i, f, g, o = jnp.split(gates, 4, axis=-1)
        i = jax.nn.sigmoid(i)
        f = jax.nn.sigmoid(f)
        g = jnp.tanh(g)
        o = jax.nn.sigmoid(o)
        c = f * c + i * g
        h = o * jnp.tanh(c)
        return (h, c), h

    init = (jnp.zeros((B, H), jnp.float32), jnp.zeros((B, H), jnp.float32))
    _, hs = jax.lax.scan(step, init, x)
    return jnp.squeeze(hs, axis=-1)


if __name__ == "__main__":
    key = jax.random.PRNGKey(0)
    T, B, I, H = 8, 2, 25, 1   # input_size=25, hidden_size=1 fixed by module

    k_x, k_wih, k_whh, k_bih, k_bhh = jax.random.split(key, 5)
    # PyTorch LSTM init: uniform(-1/sqrt(H), 1/sqrt(H)) = uniform(-1, 1)
    x = jax.random.normal(k_x, (T, B, I), jnp.float32)
    w_ih = jax.random.uniform(k_wih, (4 * H, I), jnp.float32, -1.0, 1.0)
    w_hh = jax.random.uniform(k_whh, (4 * H, H), jnp.float32, -1.0, 1.0)
    b_ih = jax.random.uniform(k_bih, (4 * H,), jnp.float32, -1.0, 1.0)
    b_hh = jax.random.uniform(k_bhh, (4 * H,), jnp.float32, -1.0, 1.0)

    out = lstm_forward(x, w_ih, w_hh, b_ih, b_hh)
    jax.block_until_ready(out)

    ref = lstm_ref(x, w_ih, w_hh, b_ih, b_hh)
    assert out.shape == (T, B), out.shape
    # Slightly looser tolerance: kernel recovers tanh(g) via 2*sigmoid(2g)-1
    # (mathematically exact, but EUP sigmoid/tanh approximations differ a hair).
    assert jnp.allclose(out, ref, atol=1e-4, rtol=1e-4), "mismatch vs reference"

    print("KERNEL_OK")
</pallas_src>

<mosaic_0001>
module attributes {stable_mosaic.version = 11 : i64} {
  func.func @lstm_kernel(%arg0: memref<25x16xf32, #tpu.memory_space<vmem>>, %arg1: memref<4x25xf32, #tpu.memory_space<vmem>>, %arg2: memref<4x1xf32, #tpu.memory_space<vmem>>, %arg3: memref<4x1xf32, #tpu.memory_space<vmem>>, %arg4: memref<8x2xf32, #tpu.memory_space<vmem>>) attributes {dimension_semantics = [], scalar_prefetch = 0 : i64, scratch_operands = 0 : i64, tpu.core_type = #tpu.core_type<tc>} {
    %c0 = arith.constant 0 : index
    %c0_0 = arith.constant 0 : index
    %0 = vector.load %arg1[%c0, %c0_0] : memref<4x25xf32, #tpu.memory_space<vmem>>, vector<4x25xf32>
    %c0_1 = arith.constant 0 : index
    %c0_2 = arith.constant 0 : index
    %1 = vector.load %arg0[%c0_1, %c0_2] : memref<25x16xf32, #tpu.memory_space<vmem>>, vector<25x16xf32>
    %cst = arith.constant dense<0.000000e+00> : vector<4x16xf32>
    %2 = tpu.matmul %0, %1, %cst {dimension_numbers = #tpu.dot_dimension_numbers<[1], [0], [0], [1], [0, 0, 1, 1], [], []>} : vector<4x25xf32>, vector<25x16xf32>, vector<4x16xf32> -> vector<4x16xf32>
    %c0_3 = arith.constant 0 : index
    %c0_4 = arith.constant 0 : index
    %3 = vector.load %arg3[%c0_3, %c0_4] : memref<4x1xf32, #tpu.memory_space<vmem>>, vector<4x1xf32>
    %4 = vector.broadcast %3 : vector<4x1xf32> to vector<4x16xf32>
    %5 = arith.addf %2, %4 : vector<4x16xf32>
    %c0_5 = arith.constant 0 : index
    %c0_6 = arith.constant 0 : index
    %6 = vector.load %arg2[%c0_5, %c0_6] : memref<4x1xf32, #tpu.memory_space<vmem>>, vector<4x1xf32>
    %7 = vector.shape_cast %6 : vector<4x1xf32> to vector<4x1xf32>
    %8 = vector.broadcast %7 : vector<4x1xf32> to vector<4x2xf32>
    %cst_7 = arith.constant 0.000000e+00 : f32
    %9 = vector.broadcast %cst_7 : f32 to vector<1x2xf32>
    %cst_8 = arith.constant 0.000000e+00 : f32
    %10 = vector.broadcast %cst_8 : f32 to vector<1x2xf32>
    %11 = vector.extract_strided_slice %5 {offsets = [0, 0], sizes = [4, 2], strides = [1, 1]} : vector<4x16xf32> to vector<4x2xf32>
    %12 = vector.broadcast %9 : vector<1x2xf32> to vector<4x2xf32>
    %13 = arith.mulf %8, %12 : vector<4x2xf32>
    %14 = arith.addf %11, %13 : vector<4x2xf32>
    %15 = arith.negf %14 : vector<4x2xf32>
    %16 = math.exp %15 : vector<4x2xf32>
    %cst_9 = arith.constant 1.000000e+00 : f32
    %17 = vector.broadcast %cst_9 : f32 to vector<4x2xf32>
    %18 = arith.addf %17, %16 : vector<4x2xf32>
    %19 = arith.divf %17, %18 : vector<4x2xf32>
    %20 = vector.extract_strided_slice %19 {offsets = [0, 0], sizes = [1, 2], strides = [1, 1]} : vector<4x2xf32> to vector<1x2xf32>
    %21 = vector.extract_strided_slice %19 {offsets = [1, 0], sizes = [1, 2], strides = [1, 1]} : vector<4x2xf32> to vector<1x2xf32>
    %22 = vector.extract_strided_slice %19 {offsets = [2, 0], sizes = [1, 2], strides = [1, 1]} : vector<4x2xf32> to vector<1x2xf32>
    %cst_10 = arith.constant 2.000000e+00 : f32
    %23 = vector.broadcast %cst_10 : f32 to vector<1x2xf32>
    %24 = arith.mulf %23, %22 : vector<1x2xf32>
    %cst_11 = arith.constant 1.000000e+00 : f32
    %25 = vector.broadcast %cst_11 : f32 to vector<1x2xf32>
    %26 = arith.subf %24, %25 : vector<1x2xf32>
    %27 = vector.extract_strided_slice %19 {offsets = [3, 0], sizes = [1, 2], strides = [1, 1]} : vector<4x2xf32> to vector<1x2xf32>
    %28 = arith.mulf %21, %10 : vector<1x2xf32>
    %29 = arith.mulf %20, %26 : vector<1x2xf32>
    %30 = arith.addf %28, %29 : vector<1x2xf32>
    %31 = math.tanh %30 : vector<1x2xf32>
    %32 = arith.mulf %27, %31 : vector<1x2xf32>
    %33 = vector.extract_strided_slice %5 {offsets = [0, 2], sizes = [4, 2], strides = [1, 1]} : vector<4x16xf32> to vector<4x2xf32>
    %34 = vector.broadcast %32 : vector<1x2xf32> to vector<4x2xf32>
    %35 = arith.mulf %8, %34 : vector<4x2xf32>
    %36 = arith.addf %33, %35 : vector<4x2xf32>
    %37 = arith.negf %36 : vector<4x2xf32>
    %38 = math.exp %37 : vector<4x2xf32>
    %cst_12 = arith.constant 1.000000e+00 : f32
    %39 = vector.broadcast %cst_12 : f32 to vector<4x2xf32>
    %40 = arith.addf %39, %38 : vector<4x2xf32>
    %41 = arith.divf %39, %40 : vector<4x2xf32>
    %42 = vector.extract_strided_slice %41 {offsets = [0, 0], sizes = [1, 2], strides = [1, 1]} : vector<4x2xf32> to vector<1x2xf32>
    %43 = vector.extract_strided_slice %41 {offsets = [1, 0], sizes = [1, 2], strides = [1, 1]} : vector<4x2xf32> to vector<1x2xf32>
    %44 = vector.extract_strided_slice %41 {offsets = [2, 0], sizes = [1, 2], strides = [1, 1]} : vector<4x2xf32> to vector<1x2xf32>
    %cst_13 = arith.constant 2.000000e+00 : f32
    %45 = vector.broadcast %cst_13 : f32 to vector<1x2xf32>
    %46 = arith.mulf %45, %44 : vector<1x2xf32>
    %cst_14 = arith.constant 1.000000e+00 : f32
    %47 = vector.broadcast %cst_14 : f32 to vector<1x2xf32>
    %48 = arith.subf %46, %47 : vector<1x2xf32>
    %49 = vector.extract_strided_slice %41 {offsets = [3, 0], sizes = [1, 2], strides = [1, 1]} : vector<4x2xf32> to vector<1x2xf32>
    %50 = arith.mulf %43, %30 : vector<1x2xf32>
    %51 = arith.mulf %42, %48 : vector<1x2xf32>
    %52 = arith.addf %50, %51 : vector<1x2xf32>
    %53 = math.tanh %52 : vector<1x2xf32>
    %54 = arith.mulf %49, %53 : vector<1x2xf32>
    %55 = vector.extract_strided_slice %5 {offsets = [0, 4], sizes = [4, 2], strides = [1, 1]} : vector<4x16xf32> to vector<4x2xf32>
    %56 = vector.broadcast %54 : vector<1x2xf32> to vector<4x2xf32>
    %57 = arith.mulf %8, %56 : vector<4x2xf32>
    %58 = arith.addf %55, %57 : vector<4x2xf32>
    %59 = arith.negf %58 : vector<4x2xf32>
    %60 = math.exp %59 : vector<4x2xf32>
    %cst_15 = arith.constant 1.000000e+00 : f32
    %61 = vector.broadcast %cst_15 : f32 to vector<4x2xf32>
    %62 = arith.addf %61, %60 : vector<4x2xf32>
    %63 = arith.divf %61, %62 : vector<4x2xf32>
    %64 = vector.extract_strided_slice %63 {offsets = [0, 0], sizes = [1, 2], strides = [1, 1]} : vector<4x2xf32> to vector<1x2xf32>
    %65 = vector.extract_strided_slice %63 {offsets = [1, 0], sizes = [1, 2], strides = [1, 1]} : vector<4x2xf32> to vector<1x2xf32>
    %66 = vector.extract_strided_slice %63 {offsets = [2, 0], sizes = [1, 2], strides = [1, 1]} : vector<4x2xf32> to vector<1x2xf32>
    %cst_16 = arith.constant 2.000000e+00 : f32
    %67 = vector.broadcast %cst_16 : f32 to vector<1x2xf32>
    %68 = arith.mulf %67, %66 : vector<1x2xf32>
    %cst_17 = arith.constant 1.000000e+00 : f32
    %69 = vector.broadcast %cst_17 : f32 to vector<1x2xf32>
    %70 = arith.subf %68, %69 : vector<1x2xf32>
    %71 = vector.extract_strided_slice %63 {offsets = [3, 0], sizes = [1, 2], strides = [1, 1]} : vector<4x2xf32> to vector<1x2xf32>
    %72 = arith.mulf %65, %52 : vector<1x2xf32>
    %73 = arith.mulf %64, %70 : vector<1x2xf32>
    %74 = arith.addf %72, %73 : vector<1x2xf32>
    %75 = math.tanh %74 : vector<1x2xf32>
    %76 = arith.mulf %71, %75 : vector<1x2xf32>
    %77 = vector.extract_strided_slice %5 {offsets = [0, 6], sizes = [4, 2], strides = [1, 1]} : vector<4x16xf32> to vector<4x2xf32>
    %78 = vector.broadcast %76 : vector<1x2xf32> to vector<4x2xf32>
    %79 = arith.mulf %8, %78 : vector<4x2xf32>
    %80 = arith.addf %77, %79 : vector<4x2xf32>
    %81 = arith.negf %80 : vector<4x2xf32>
    %82 = math.exp %81 : vector<4x2xf32>
    %cst_18 = arith.constant 1.000000e+00 : f32
    %83 = vector.broadcast %cst_18 : f32 to vector<4x2xf32>
    %84 = arith.addf %83, %82 : vector<4x2xf32>
    %85 = arith.divf %83, %84 : vector<4x2xf32>
    %86 = vector.extract_strided_slice %85 {offsets = [0, 0], sizes = [1, 2], strides = [1, 1]} : vector<4x2xf32> to vector<1x2xf32>
    %87 = vector.extract_strided_slice %85 {offsets = [1, 0], sizes = [1, 2], strides = [1, 1]} : vector<4x2xf32> to vector<1x2xf32>
    %88 = vector.extract_strided_slice %85 {offsets = [2, 0], sizes = [1, 2], strides = [1, 1]} : vector<4x2xf32> to vector<1x2xf32>
    %cst_19 = arith.constant 2.000000e+00 : f32
    %89 = vector.broadcast %cst_19 : f32 to vector<1x2xf32>
    %90 = arith.mulf %89, %88 : vector<1x2xf32>
    %cst_20 = arith.constant 1.000000e+00 : f32
    %91 = vector.broadcast %cst_20 : f32 to vector<1x2xf32>
    %92 = arith.subf %90, %91 : vector<1x2xf32>
    %93 = vector.extract_strided_slice %85 {offsets = [3, 0], sizes = [1, 2], strides = [1, 1]} : vector<4x2xf32> to vector<1x2xf32>
    %94 = arith.mulf %87, %74 : vector<1x2xf32>
    %95 = arith.mulf %86, %92 : vector<1x2xf32>
    %96 = arith.addf %94, %95 : vector<1x2xf32>
    %97 = math.tanh %96 : vector<1x2xf32>
    %98 = arith.mulf %93, %97 : vector<1x2xf32>
    %99 = vector.extract_strided_slice %5 {offsets = [0, 8], sizes = [4, 2], strides = [1, 1]} : vector<4x16xf32> to vector<4x2xf32>
    %100 = vector.broadcast %98 : vector<1x2xf32> to vector<4x2xf32>
    %101 = arith.mulf %8, %100 : vector<4x2xf32>
    %102 = arith.addf %99, %101 : vector<4x2xf32>
    %103 = arith.negf %102 : vector<4x2xf32>
    %104 = math.exp %103 : vector<4x2xf32>
    %cst_21 = arith.constant 1.000000e+00 : f32
    %105 = vector.broadcast %cst_21 : f32 to vector<4x2xf32>
    %106 = arith.addf %105, %104 : vector<4x2xf32>
    %107 = arith.divf %105, %106 : vector<4x2xf32>
    %108 = vector.extract_strided_slice %107 {offsets = [0, 0], sizes = [1, 2], strides = [1, 1]} : vector<4x2xf32> to vector<1x2xf32>
    %109 = vector.extract_strided_slice %107 {offsets = [1, 0], sizes = [1, 2], strides = [1, 1]} : vector<4x2xf32> to vector<1x2xf32>
    %110 = vector.extract_strided_slice %107 {offsets = [2, 0], sizes = [1, 2], strides = [1, 1]} : vector<4x2xf32> to vector<1x2xf32>
    %cst_22 = arith.constant 2.000000e+00 : f32
    %111 = vector.broadcast %cst_22 : f32 to vector<1x2xf32>
    %112 = arith.mulf %111, %110 : vector<1x2xf32>
    %cst_23 = arith.constant 1.000000e+00 : f32
    %113 = vector.broadcast %cst_23 : f32 to vector<1x2xf32>
    %114 = arith.subf %112, %113 : vector<1x2xf32>
    %115 = vector.extract_strided_slice %107 {offsets = [3, 0], sizes = [1, 2], strides = [1, 1]} : vector<4x2xf32> to vector<1x2xf32>
    %116 = arith.mulf %109, %96 : vector<1x2xf32>
    %117 = arith.mulf %108, %114 : vector<1x2xf32>
    %118 = arith.addf %116, %117 : vector<1x2xf32>
    %119 = math.tanh %118 : vector<1x2xf32>
    %120 = arith.mulf %115, %119 : vector<1x2xf32>
    %121 = vector.extract_strided_slice %5 {offsets = [0, 10], sizes = [4, 2], strides = [1, 1]} : vector<4x16xf32> to vector<4x2xf32>
    %122 = vector.broadcast %120 : vector<1x2xf32> to vector<4x2xf32>
    %123 = arith.mulf %8, %122 : vector<4x2xf32>
    %124 = arith.addf %121, %123 : vector<4x2xf32>
    %125 = arith.negf %124 : vector<4x2xf32>
    %126 = math.exp %125 : vector<4x2xf32>
    %cst_24 = arith.constant 1.000000e+00 : f32
    %127 = vector.broadcast %cst_24 : f32 to vector<4x2xf32>
    %128 = arith.addf %127, %126 : vector<4x2xf32>
    %129 = arith.divf %127, %128 : vector<4x2xf32>
    %130 = vector.extract_strided_slice %129 {offsets = [0, 0], sizes = [1, 2], strides = [1, 1]} : vector<4x2xf32> to vector<1x2xf32>
    %131 = vector.extract_strided_slice %129 {offsets = [1, 0], sizes = [1, 2], strides = [1, 1]} : vector<4x2xf32> to vector<1x2xf32>
    %132 = vector.extract_strided_slice %129 {offsets = [2, 0], sizes = [1, 2], strides = [1, 1]} : vector<4x2xf32> to vector<1x2xf32>
    %cst_25 = arith.constant 2.000000e+00 : f32
    %133 = vector.broadcast %cst_25 : f32 to vector<1x2xf32>
    %134 = arith.mulf %133, %132 : vector<1x2xf32>
    %cst_26 = arith.constant 1.000000e+00 : f32
    %135 = vector.broadcast %cst_26 : f32 to vector<1x2xf32>
    %136 = arith.subf %134, %135 : vector<1x2xf32>
    %137 = vector.extract_strided_slice %129 {offsets = [3, 0], sizes = [1, 2], strides = [1, 1]} : vector<4x2xf32> to vector<1x2xf32>
    %138 = arith.mulf %131, %118 : vector<1x2xf32>
    %139 = arith.mulf %130, %136 : vector<1x2xf32>
    %140 = arith.addf %138, %139 : vector<1x2xf32>
    %141 = math.tanh %140 : vector<1x2xf32>
    %142 = arith.mulf %137, %141 : vector<1x2xf32>
    %143 = vector.extract_strided_slice %5 {offsets = [0, 12], sizes = [4, 2], strides = [1, 1]} : vector<4x16xf32> to vector<4x2xf32>
    %144 = vector.broadcast %142 : vector<1x2xf32> to vector<4x2xf32>
    %145 = arith.mulf %8, %144 : vector<4x2xf32>
    %146 = arith.addf %143, %145 : vector<4x2xf32>
    %147 = arith.negf %146 : vector<4x2xf32>
    %148 = math.exp %147 : vector<4x2xf32>
    %cst_27 = arith.constant 1.000000e+00 : f32
    %149 = vector.broadcast %cst_27 : f32 to vector<4x2xf32>
    %150 = arith.addf %149, %148 : vector<4x2xf32>
    %151 = arith.divf %149, %150 : vector<4x2xf32>
    %152 = vector.extract_strided_slice %151 {offsets = [0, 0], sizes = [1, 2], strides = [1, 1]} : vector<4x2xf32> to vector<1x2xf32>
    %153 = vector.extract_strided_slice %151 {offsets = [1, 0], sizes = [1, 2], strides = [1, 1]} : vector<4x2xf32> to vector<1x2xf32>
    %154 = vector.extract_strided_slice %151 {offsets = [2, 0], sizes = [1, 2], strides = [1, 1]} : vector<4x2xf32> to vector<1x2xf32>
    %cst_28 = arith.constant 2.000000e+00 : f32
    %155 = vector.broadcast %cst_28 : f32 to vector<1x2xf32>
    %156 = arith.mulf %155, %154 : vector<1x2xf32>
    %cst_29 = arith.constant 1.000000e+00 : f32
    %157 = vector.broadcast %cst_29 : f32 to vector<1x2xf32>
    %158 = arith.subf %156, %157 : vector<1x2xf32>
    %159 = vector.extract_strided_slice %151 {offsets = [3, 0], sizes = [1, 2], strides = [1, 1]} : vector<4x2xf32> to vector<1x2xf32>
    %160 = arith.mulf %153, %140 : vector<1x2xf32>
    %161 = arith.mulf %152, %158 : vector<1x2xf32>
    %162 = arith.addf %160, %161 : vector<1x2xf32>
    %163 = math.tanh %162 : vector<1x2xf32>
    %164 = arith.mulf %159, %163 : vector<1x2xf32>
    %165 = vector.extract_strided_slice %5 {offsets = [0, 14], sizes = [4, 2], strides = [1, 1]} : vector<4x16xf32> to vector<4x2xf32>
    %166 = vector.broadcast %164 : vector<1x2xf32> to vector<4x2xf32>
    %167 = arith.mulf %8, %166 : vector<4x2xf32>
    %168 = arith.addf %165, %167 : vector<4x2xf32>
    %169 = arith.negf %168 : vector<4x2xf32>
    %170 = math.exp %169 : vector<4x2xf32>
    %cst_30 = arith.constant 1.000000e+00 : f32
    %171 = vector.broadcast %cst_30 : f32 to vector<4x2xf32>
    %172 = arith.addf %171, %170 : vector<4x2xf32>
    %173 = arith.divf %171, %172 : vector<4x2xf32>
    %174 = vector.extract_strided_slice %173 {offsets = [0, 0], sizes = [1, 2], strides = [1, 1]} : vector<4x2xf32> to vector<1x2xf32>
    %175 = vector.extract_strided_slice %173 {offsets = [1, 0], sizes = [1, 2], strides = [1, 1]} : vector<4x2xf32> to vector<1x2xf32>
    %176 = vector.extract_strided_slice %173 {offsets = [2, 0], sizes = [1, 2], strides = [1, 1]} : vector<4x2xf32> to vector<1x2xf32>
    %cst_31 = arith.constant 2.000000e+00 : f32
    %177 = vector.broadcast %cst_31 : f32 to vector<1x2xf32>
    %178 = arith.mulf %177, %176 : vector<1x2xf32>
    %cst_32 = arith.constant 1.000000e+00 : f32
    %179 = vector.broadcast %cst_32 : f32 to vector<1x2xf32>
    %180 = arith.subf %178, %179 : vector<1x2xf32>
    %181 = vector.extract_strided_slice %173 {offsets = [3, 0], sizes = [1, 2], strides = [1, 1]} : vector<4x2xf32> to vector<1x2xf32>
    %182 = arith.mulf %175, %162 : vector<1x2xf32>
    %183 = arith.mulf %174, %180 : vector<1x2xf32>
    %184 = arith.addf %182, %183 : vector<1x2xf32>
    %185 = math.tanh %184 : vector<1x2xf32>
    %186 = arith.mulf %181, %185 : vector<1x2xf32>
    %c0_33 = arith.constant 0 : index
    %c0_34 = arith.constant 0 : index
    %187 = vector.load %arg4[%c0_33, %c0_34] : memref<8x2xf32, #tpu.memory_space<vmem>>, vector<1x2xf32>
    tpu.vector_store %arg4[%c0_33, %c0_34], %32 {strides = array<i32>} : memref<8x2xf32, #tpu.memory_space<vmem>>, vector<1x2xf32>,
    %c1 = arith.constant 1 : index
    %c0_35 = arith.constant 0 : index
    %188 = vector.load %arg4[%c1, %c0_35] : memref<8x2xf32, #tpu.memory_space<vmem>>, vector<1x2xf32>
    tpu.vector_store %arg4[%c1, %c0_35], %54 {strides = array<i32>} : memref<8x2xf32, #tpu.memory_space<vmem>>, vector<1x2xf32>,
    %c2 = arith.constant 2 : index
    %c0_36 = arith.constant 0 : index
    %189 = vector.load %arg4[%c2, %c0_36] : memref<8x2xf32, #tpu.memory_space<vmem>>, vector<1x2xf32>
    tpu.vector_store %arg4[%c2, %c0_36], %76 {strides = array<i32>} : memref<8x2xf32, #tpu.memory_space<vmem>>, vector<1x2xf32>,
    %c3 = arith.constant 3 : index
    %c0_37 = arith.constant 0 : index
    %190 = vector.load %arg4[%c3, %c0_37] : memref<8x2xf32, #tpu.memory_space<vmem>>, vector<1x2xf32>
    tpu.vector_store %arg4[%c3, %c0_37], %98 {strides = array<i32>} : memref<8x2xf32, #tpu.memory_space<vmem>>, vector<1x2xf32>,
    %c4 = arith.constant 4 : index
    %c0_38 = arith.constant 0 : index
    %191 = vector.load %arg4[%c4, %c0_38] : memref<8x2xf32, #tpu.memory_space<vmem>>, vector<1x2xf32>
    tpu.vector_store %arg4[%c4, %c0_38], %120 {strides = array<i32>} : memref<8x2xf32, #tpu.memory_space<vmem>>, vector<1x2xf32>,
    %c5 = arith.constant 5 : index
    %c0_39 = arith.constant 0 : index
    %192 = vector.load %arg4[%c5, %c0_39] : memref<8x2xf32, #tpu.memory_space<vmem>>, vector<1x2xf32>
    tpu.vector_store %arg4[%c5, %c0_39], %142 {strides = array<i32>} : memref<8x2xf32, #tpu.memory_space<vmem>>, vector<1x2xf32>,
    %c6 = arith.constant 6 : index
    %c0_40 = arith.constant 0 : index
    %193 = vector.load %arg4[%c6, %c0_40] : memref<8x2xf32, #tpu.memory_space<vmem>>, vector<1x2xf32>
    tpu.vector_store %arg4[%c6, %c0_40], %164 {strides = array<i32>} : memref<8x2xf32, #tpu.memory_space<vmem>>, vector<1x2xf32>,
    %c7 = arith.constant 7 : index
    %c0_41 = arith.constant 0 : index
    %194 = vector.load %arg4[%c7, %c0_41] : memref<8x2xf32, #tpu.memory_space<vmem>>, vector<1x2xf32>
    tpu.vector_store %arg4[%c7, %c0_41], %186 {strides = array<i32>} : memref<8x2xf32, #tpu.memory_space<vmem>>, vector<1x2xf32>,
    return
  }
}

</mosaic_0001>

<llo_original>
// kernel: tpu_custom_call.1
$region0: #{tpu_custom_call.1}
  #allocation0 [shape = 'u32[]', space=smem, size = 0x4, offset = 0x4, fixed_abs, tag = 'smem constant byte address 0x4 - core index']
  #allocation1 [shape = 'u32[72,128]{1,0:T(1,128)}', space=vmem, size = 0x9000, scoped, tag = 'internal scratch']
  %s0 = inlined_call_operand.vmem [shape: f32[25,16], index: 0, kind: input, shape index: {}]
  %s1 = inlined_call_operand.vmem [shape: f32[4,25], index: 1, kind: input, shape index: {}]
  %s2 = inlined_call_operand.vmem [shape: f32[4,1], index: 2, kind: input, shape index: {}]
  %s3 = inlined_call_operand.vmem [shape: f32[4,1], index: 3, kind: input, shape index: {}]
  %s4 = inlined_call_operand.vmem [shape: f32[8,2], index: 4, kind: output, shape index: {}]
  %s5 = sld [smem:[#allocation0]]
  $region26: #{tpu_custom_call.1} parent=0
    _
  %s7 = ssub.s32 1, %s5
  %s8 = scalar_select 0, %s7, %s5
  // Predicated region
  $region2: #{tpu_custom_call.1} parent=0 // pred_check
    _
  $region3: #{tpu_custom_call.1} parent=0 // pred_check_branch
    %10 = sbr.rel (0) target = $region5
  $region4: #{tpu_custom_call.1} parent=0 // pred_region
    _
  $region5: #{tpu_custom_call.1} parent=0 // pred_fallthru
    _
  // Predicated region
  $region6: #{tpu_custom_call.1} parent=0 // pred_check
    _
  $region7: #{tpu_custom_call.1} parent=0 // pred_check_branch
    %12 = sbr.rel (0) target = $region9
  $region8: #{tpu_custom_call.1} parent=0 // pred_region
    _
  $region9: #{tpu_custom_call.1} parent=0 // pred_fallthru
    _
  // Predicated region
  $region10: #{tpu_custom_call.1} parent=0 // pred_check
    _
  $region11: #{tpu_custom_call.1} parent=0 // pred_check_branch
    %14 = sbr.rel (0) target = $region13
  $region12: #{tpu_custom_call.1} parent=0 // pred_region
    _
  $region13: #{tpu_custom_call.1} parent=0 // pred_fallthru
    _
  // Predicated region
  $region14: #{tpu_custom_call.1} parent=0 // pred_check
    _
  $region15: #{tpu_custom_call.1} parent=0 // pred_check_branch
    %16 = sbr.rel (0) target = $region17
  $region16: #{tpu_custom_call.1} parent=0 // pred_region
    _
  $region17: #{tpu_custom_call.1} parent=0 // pred_fallthru
    _
  %v17 = vld [vmem:[%s1] sm:$0xf]
  %v18 = vld [vmem:[%s0] sm:$0xff]
  %v19 = vld [vmem:[%s0 + $0x8] sm:$0xff]
  %v20 = vld [vmem:[%s0 + $0x10] sm:$0xff]
  %v21 = vld [vmem:[%s0 + $0x18] sm:$0x1]
  %v22 = vld [vmem:[%s3] sm:$0xf]
  %24 = vset.pattern.permute.xlu0 0
  %25 = vperm.xlu0 %24, %v22
  %v26 = vpop.permute.xlu0 %25
  %vm28 = vcmask 203776
  %v30 = vsel %vm28, %v17, 0
  %vm32 = vcmask 1040384
  %v34 = vsel %vm32, %v21, 0
  %36 = vmatpush.msra.mxu0 0.0
  %37 = vmatpush.msra.mxu0 0.0
  %38 = vmatpush.msra.mxu0 0.0
  %39 = vmatpush.msra.mxu0 0.0
  %40 = vmatpush.msra.mxu0 0.0
  %41 = vmatpush.msra.mxu0 0.0
  %42 = vmatpush.msra.mxu0 0.0
  %43 = vmatpush.msra.mxu0 0.0
  %44 = vmatpush.msra.mxu0 0.0
  %45 = vmatpush.msra.mxu0 0.0
  %46 = vmatpush.msra.mxu0 0.0
  %47 = vmatpush.msra.mxu0 0.0
  %48 = vmatpush.msra.mxu0 %v34
  %49 = vmatpush.msra.mxu0 %v20
  %50 = vmatpush.msra.mxu0 %v19
  %51 = vmatpush.msra.mxu0 %v18
  %52 = vmatmul.f32.gmra.mxu0 %v30
  %v53 = vpop.f32.mrf.mxu0
  %v54 = vadd.f32 %v26, %v53
  %55 = vdwg.mxu0
  %v56 = vld [vmem:[%s2] sm:$0xf]
  %58 = vset.pattern.permute.xlu0 0
  %59 = vperm.xlu0 %58, %v56
  %v60 = vpop.permute.xlu0 %59
  %v62 = vmul.f32 %v60, 0.0
  %v63 = vadd.f32 %v54, %v62
  %v64 = vxor.u32 %v63, 2147483648
  %v65 = vmul.f32 %v64, 1.442695
  %v66 = vpow.pop %v65
  %v67 = vadd.f32 %v66, 1.0
  %v68 = vrcp.pop %v67
  %v69 = vmul.f32 %v67, %v68
  %v70 = vsub.f32 1.0, %v69
  %v71 = vmul.f32 %v68, %v70
  %v72 = vadd.f32 %v68, %v71
  %vm73 = vweird.f32 %v67
  %vm74 = vweird.f32 %v68
  %vm75 = vmor %vm73, %vm74
  %v76 = vsel %vm75, %v68, %v72
  %v77 = vand.u32 2147483647, %v67
  %vm78 = vcmp.eq.f32.partialorder %v77, 8.507059e+37
  %v79 = vand.u32 %v67, 2147483648
  %v80 = vor.u32 1.1754944e-38, %v79
  %v81 = vsel %vm78, %v80, %v76
  %v82 = vmul.f32 1.0, %v81
  %v83 = vmul.f32 %v82, 2.0
  %v84 = vsub.f32 %v83, 1.0
  %v85 = vmul.f32 %v82, 0.0
  %v87 = vrot.slane %v84, 2
  %v89 = vmul.f32 %v82, %v87
  %v91 = vrot.slane %v89, 7
  %v93 = vadd.f32 %v85, %v91
  %v94 = vtanh.pop %v93
  %v96 = vrot.slane %v94, 6
  %v98 = vmul.f32 %v82, %v96
  %v99 = vperm.slane %v98, 3
  %v100 = vmul.f32 %v60, %v99
  %102 = vrot.lane.b32.xlu0 %v100, 2
  %v103 = vpop.permute.xlu0 %102
  %v105 = vadd.f32 %v54, %v103
  %v106 = vxor.u32 %v105, 2147483648
  %v107 = vmul.f32 %v106, 1.442695
  %v108 = vpow.pop %v107
  %v109 = vadd.f32 %v108, 1.0
  %v110 = vrcp.pop %v109
  %v111 = vmul.f32 %v109, %v110
  %v112 = vsub.f32 1.0, %v111
  %v113 = vmul.f32 %v110, %v112
  %v114 = vadd.f32 %v110, %v113
  %vm115 = vweird.f32 %v109
  %vm116 = vweird.f32 %v110
  %vm117 = vmor %vm115, %vm116
  %v118 = vsel %vm117, %v110, %v114
  %v119 = vand.u32 2147483647, %v109
  %vm120 = vcmp.eq.f32.partialorder %v119, 8.507059e+37
  %v121 = vand.u32 %v109, 2147483648
  %v122 = vor.u32 1.1754944e-38, %v121
  %v123 = vsel %vm120, %v122, %v118
  %v124 = vmul.f32 1.0, %v123
  %v125 = vmul.f32 %v124, 2.0
  %v126 = vsub.f32 %v125, 1.0
  %128 = vrot.lane.b32.xlu0 %v93, 2
  %v129 = vpop.permute.xlu0 %128
  %v131 = vmul.f32 %v124, %v129
  %v133 = vrot.slane %v126, 2
  %v135 = vmul.f32 %v124, %v133
  %v137 = vrot.slane %v135, 7
  %v139 = vadd.f32 %v131, %v137
  %v140 = vtanh.pop %v139
  %v142 = vrot.slane %v140, 6
  %v144 = vmul.f32 %v124, %v142
  %v145 = vperm.slane %v144, 3
  %v146 = vmul.f32 %v60, %v145
  %148 = vrot.lane.b32.xlu0 %v146, 2
  %v149 = vpop.permute.xlu0 %148
  %v151 = vadd.f32 %v54, %v149
  %v152 = vxor.u32 %v151, 2147483648
  %v153 = vmul.f32 %v152, 1.442695
  %v154 = vpow.pop %v153
  %v155 = vadd.f32 %v154, 1.0
  %v156 = vrcp.pop %v155
  %v157 = vmul.f32 %v155, %v156
  %v158 = vsub.f32 1.0, %v157
  %v159 = vmul.f32 %v156, %v158
  %v160 = vadd.f32 %v156, %v159
  %vm161 = vweird.f32 %v155
  %vm162 = vweird.f32 %v156
  %vm163 = vmor %vm161, %vm162
  %v164 = vsel %vm163, %v156, %v160
  %v165 = vand.u32 2147483647, %v155
  %vm166 = vcmp.eq.f32.partialorder %v165, 8.507059e+37
  %v167 = vand.u32 %v155, 2147483648
  %v168 = vor.u32 1.1754944e-38, %v167
  %v169 = vsel %vm166, %v168, %v164
  %v170 = vmul.f32 1.0, %v169
  %v171 = vmul.f32 %v170, 2.0
  %v172 = vsub.f32 %v171, 1.0
  %174 = vrot.lane.b32.xlu0 %v139, 2
  %v175 = vpop.permute.xlu0 %174
  %v177 = vmul.f32 %v170, %v175
  %v179 = vrot.slane %v172, 2
  %v181 = vmul.f32 %v170, %v179
  %v183 = vrot.slane %v181, 7
  %v185 = vadd.f32 %v177, %v183
  %v186 = vtanh.pop %v185
  %v188 = vrot.slane %v186, 6
  %v190 = vmul.f32 %v170, %v188
  %v191 = vperm.slane %v190, 3
  %v192 = vmul.f32 %v60, %v191
  %194 = vrot.lane.b32.xlu0 %v192, 2
  %v195 = vpop.permute.xlu0 %194
  %v197 = vadd.f32 %v54, %v195
  %v198 = vxor.u32 %v197, 2147483648
  %v199 = vmul.f32 %v198, 1.442695
  %v200 = vpow.pop %v199
  %v201 = vadd.f32 %v200, 1.0
  %v202 = vrcp.pop %v201
  %v203 = vmul.f32 %v201, %v202
  %v204 = vsub.f32 1.0, %v203
  %v205 = vmul.f32 %v202, %v204
  %v206 = vadd.f32 %v202, %v205
  %vm207 = vweird.f32 %v201
  %vm208 = vweird.f32 %v202
  %vm209 = vmor %vm207, %vm208
  %v210 = vsel %vm209, %v202, %v206
  %v211 = vand.u32 2147483647, %v201
  %vm212 = vcmp.eq.f32.partialorder %v211, 8.507059e+37
  %v213 = vand.u32 %v201, 2147483648
  %v214 = vor.u32 1.1754944e-38, %v213
  %v215 = vsel %vm212, %v214, %v210
  %v216 = vmul.f32 1.0, %v215
  %v217 = vmul.f32 %v216, 2.0
  %v218 = vsub.f32 %v217, 1.0
  %220 = vrot.lane.b32.xlu0 %v185, 2
  %v221 = vpop.permute.xlu0 %220
  %v223 = vmul.f32 %v216, %v221
  %v225 = vrot.slane %v218, 2
  %v227 = vmul.f32 %v216, %v225
  %v229 = vrot.slane %v227, 7
  %v231 = vadd.f32 %v223, %v229
  %v232 = vtanh.pop %v231
  %v234 = vrot.slane %v232, 6
  %v236 = vmul.f32 %v216, %v234
  %v237 = vperm.slane %v236, 3
  %v238 = vmul.f32 %v60, %v237
  %240 = vrot.lane.b32.xlu0 %v238, 2
  %v241 = vpop.permute.xlu0 %240
  %v243 = vadd.f32 %v54, %v241
  %v244 = vxor.u32 %v243, 2147483648
  %v245 = vmul.f32 %v244, 1.442695
  %v246 = vpow.pop %v245
  %v247 = vadd.f32 %v246, 1.0
  %v248 = vrcp.pop %v247
  %v249 = vmul.f32 %v247, %v248
  %v250 = vsub.f32 1.0, %v249
  %v251 = vmul.f32 %v248, %v250
  %v252 = vadd.f32 %v248, %v251
  %vm253 = vweird.f32 %v247
  %vm254 = vweird.f32 %v248
  %vm255 = vmor %vm253, %vm254
  %v256 = vsel %vm255, %v248, %v252
  %v257 = vand.u32 2147483647, %v247
  %vm258 = vcmp.eq.f32.partialorder %v257, 8.507059e+37
  %v259 = vand.u32 %v247, 2147483648
  %v260 = vor.u32 1.1754944e-38, %v259
  %v261 = vsel %vm258, %v260, %v256
  %v262 = vmul.f32 1.0, %v261
  %v263 = vmul.f32 %v262, 2.0
  %v264 = vsub.f32 %v263, 1.0
  %266 = vrot.lane.b32.xlu0 %v231, 2
  %v267 = vpop.permute.xlu0 %266
  %v269 = vmul.f32 %v262, %v267
  %v271 = vrot.slane %v264, 2
  %v273 = vmul.f32 %v262, %v271
  %v275 = vrot.slane %v273, 7
  %v277 = vadd.f32 %v269, %v275
  %v278 = vtanh.pop %v277
  %v280 = vrot.slane %v278, 6
  %v282 = vmul.f32 %v262, %v280
  %v283 = vperm.slane %v282, 3
  %v284 = vmul.f32 %v60, %v283
  %286 = vrot.lane.b32.xlu0 %v284, 2
  %v287 = vpop.permute.xlu0 %286
  %v289 = vadd.f32 %v54, %v287
  %v290 = vxor.u32 %v289, 2147483648
  %v291 = vmul.f32 %v290, 1.442695
  %v292 = vpow.pop %v291
  %v293 = vadd.f32 %v292, 1.0
  %v294 = vrcp.pop %v293
  %v295 = vmul.f32 %v293, %v294
  %v296 = vsub.f32 1.0, %v295
  %v297 = vmul.f32 %v294, %v296
  %v298 = vadd.f32 %v294, %v297
  %vm299 = vweird.f32 %v293
  %vm300 = vweird.f32 %v294
  %vm301 = vmor %vm299, %vm300
  %v302 = vsel %vm301, %v294, %v298
  %v303 = vand.u32 2147483647, %v293
  %vm304 = vcmp.eq.f32.partialorder %v303, 8.507059e+37
  %v305 = vand.u32 %v293, 2147483648
  %v306 = vor.u32 1.1754944e-38, %v305
  %v307 = vsel %vm304, %v306, %v302
  %v308 = vmul.f32 1.0, %v307
  %v309 = vmul.f32 %v308, 2.0
  %v310 = vsub.f32 %v309, 1.0
  %312 = vrot.lane.b32.xlu0 %v277, 2
  %v313 = vpop.permute.xlu0 %312
  %v315 = vmul.f32 %v308, %v313
  %v317 = vrot.slane %v310, 2
  %v319 = vmul.f32 %v308, %v317
  %v321 = vrot.slane %v319, 7
  %v323 = vadd.f32 %v315, %v321
  %v324 = vtanh.pop %v323
  %v326 = vrot.slane %v324, 6
  %v328 = vmul.f32 %v308, %v326
  %v329 = vperm.slane %v328, 3
  %v330 = vmul.f32 %v60, %v329
  %332 = vrot.lane.b32.xlu0 %v330, 2
  %v333 = vpop.permute.xlu0 %332
  %v335 = vadd.f32 %v54, %v333
  %v336 = vxor.u32 %v335, 2147483648
  %v337 = vmul.f32 %v336, 1.442695
  %v338 = vpow.pop %v337
  %v339 = vadd.f32 %v338, 1.0
  %v340 = vrcp.pop %v339
  %v341 = vmul.f32 %v339, %v340
  %v342 = vsub.f32 1.0, %v341
  %v343 = vmul.f32 %v340, %v342
  %v344 = vadd.f32 %v340, %v343
  %vm345 = vweird.f32 %v339
  %vm346 = vweird.f32 %v340
  %vm347 = vmor %vm345, %vm346
  %v348 = vsel %vm347, %v340, %v344
  %v349 = vand.u32 2147483647, %v339
  %vm350 = vcmp.eq.f32.partialorder %v349, 8.507059e+37
  %v351 = vand.u32 %v339, 2147483648
  %v352 = vor.u32 1.1754944e-38, %v351
  %v353 = vsel %vm350, %v352, %v348
  %v354 = vmul.f32 1.0, %v353
  %v355 = vmul.f32 %v354, 2.0
  %v356 = vsub.f32 %v355, 1.0
  %358 = vrot.lane.b32.xlu0 %v323, 2
  %v359 = vpop.permute.xlu0 %358
  %v361 = vmul.f32 %v354, %v359
  %v363 = vrot.slane %v356, 2
  %v365 = vmul.f32 %v354, %v363
  %v367 = vrot.slane %v365, 7
  %v369 = vadd.f32 %v361, %v367
  %v370 = vtanh.pop %v369
  %v372 = vrot.slane %v370, 6
  %v374 = vmul.f32 %v354, %v372
  %v375 = vperm.slane %v374, 3
  %v376 = vmul.f32 %v60, %v375
  %378 = vrot.lane.b32.xlu0 %v376, 2
  %v379 = vpop.permute.xlu0 %378
  %v381 = vadd.f32 %v54, %v379
  %v382 = vxor.u32 %v381, 2147483648
  %v383 = vmul.f32 %v382, 1.442695
  %v384 = vpow.pop %v383
  %v385 = vadd.f32 %v384, 1.0
  %v386 = vrcp.pop %v385
  %v387 = vmul.f32 %v385, %v386
  %v388 = vsub.f32 1.0, %v387
  %v389 = vmul.f32 %v386, %v388
  %v390 = vadd.f32 %v386, %v389
  %vm391 = vweird.f32 %v385
  %vm392 = vweird.f32 %v386
  %vm393 = vmor %vm391, %vm392
  %v394 = vsel %vm393, %v386, %v390
  %v395 = vand.u32 2147483647, %v385
  %vm396 = vcmp.eq.f32.partialorder %v395, 8.507059e+37
  %v397 = vand.u32 %v385, 2147483648
  %v398 = vor.u32 1.1754944e-38, %v397
  %v399 = vsel %vm396, %v398, %v394
  %v400 = vmul.f32 1.0, %v399
  %v401 = vmul.f32 %v400, 2.0
  %v402 = vsub.f32 %v401, 1.0
  %404 = vrot.lane.b32.xlu0 %v369, 2
  %v405 = vpop.permute.xlu0 %404
  %v407 = vmul.f32 %v400, %v405
  %v409 = vrot.slane %v402, 2
  %v411 = vmul.f32 %v400, %v409
  %v413 = vrot.slane %v411, 7
  %v415 = vadd.f32 %v407, %v413
  %v416 = vtanh.pop %v415
  %v418 = vrot.slane %v416, 6
  %v420 = vmul.f32 %v400, %v418
  %vm421 = vcmask 11267
  %422 = vst.msk [vmem:[%s4 - $0x3] sm:$0x8] %vm421, %v98
  %424 = vrot.lane.b32.xlu0 %v144, 126
  %v425 = vpop.permute.xlu0 %424
  %427 = vst.msk [vmem:[%s4 - $0x2] sm:$0x8] %vm421, %v425
  %429 = vrot.lane.b32.xlu0 %v190, 124
  %v430 = vpop.permute.xlu0 %429
  %432 = vst.msk [vmem:[%s4 - $0x1] sm:$0x8] %vm421, %v430
  %434 = vrot.lane.b32.xlu0 %v236, 122
  %v435 = vpop.permute.xlu0 %434
  %437 = vst.msk [vmem:[%s4] sm:$0x8] %vm421, %v435
  %439 = vrot.lane.b32.xlu0 %v282, 120
  %v440 = vpop.permute.xlu0 %439
  %442 = vst.msk [vmem:[%s4 + $0x1] sm:$0x8] %vm421, %v440
  %444 = vrot.lane.b32.xlu0 %v328, 118
  %v445 = vpop.permute.xlu0 %444
  %447 = vst.msk [vmem:[%s4 + $0x2] sm:$0x8] %vm421, %v445
  %449 = vrot.lane.b32.xlu0 %v374, 116
  %v450 = vpop.permute.xlu0 %449
  %452 = vst.msk [vmem:[%s4 + $0x3] sm:$0x8] %vm421, %v450
  %454 = vrot.lane.b32.xlu0 %v420, 114
  %v455 = vpop.permute.xlu0 %454
  %457 = vst.msk [vmem:[%s4 + $0x4] sm:$0x8] %vm421, %v455
  // Predicated region
  $region18: #{tpu_custom_call.1} parent=0 // pred_check
    _
  $region19: #{tpu_custom_call.1} parent=0 // pred_check_branch
    %459 = sbr.rel (0) target = $region21
  $region20: #{tpu_custom_call.1} parent=0 // pred_region
    _
  $region21: #{tpu_custom_call.1} parent=0 // pred_fallthru
    _
  // Predicated region
  $region22: #{tpu_custom_call.1} parent=0 // pred_check
    _
  $region23: #{tpu_custom_call.1} parent=0 // pred_check_branch
    %461 = sbr.rel (0) target = $region25
  $region24: #{tpu_custom_call.1} parent=0 // pred_region
    _
  $region25: #{tpu_custom_call.1} parent=0 // pred_fallthru
    _

</llo_original>
